<compile_context>
chip_gen: v7x
topology: tpu7x:2x2x1
jax: 0.10.0
libtpu: 0.0.40
codegen_flags: <defaults>
</compile_context>

<pallas_src>
import functools

import jax
import jax.numpy as jnp
from jax.experimental import pallas as pl
from jax.experimental.pallas import tpu as pltpu


def critic_kernel(s_ref, a_ref, w1s_ref, w1a_ref, b1_ref, w2_ref, b2_ref,
                  w3_ref, b3_ref, o_ref):
    # Everything is in transposed (features, batch_tile) layout: the batch
    # tile is lane-dense; features live on sublanes.
    # Layer 1: (128, sd)@(sd, TB) + (128, ad)@(ad, TB) -> (128, TB), f32 acc.
    h1 = jnp.dot(w1s_ref[...], s_ref[...], preferred_element_type=jnp.float32)
    h1 = h1 + jnp.dot(w1a_ref[...], a_ref[...],
                      preferred_element_type=jnp.float32)
    h1 = jnp.maximum(h1 + b1_ref[...], 0.0)            # f32 bias + ReLU (VPU)
    # Layer 2: (64, 128)@(128, TB) -> (64, TB)
    h2 = jnp.dot(w2_ref[...], h1.astype(w2_ref.dtype),
                 preferred_element_type=jnp.float32)
    h2 = jnp.maximum(h2 + b2_ref[...], 0.0)
    # Layer 3: (1, 64)@(64, TB) -> (1, TB)  (unmasked lane-dense output row)
    out = jnp.dot(w3_ref[...], h2.astype(w3_ref.dtype),
                  preferred_element_type=jnp.float32)
    o_ref[...] = (out + b3_ref[0, 0]).astype(o_ref.dtype)


def init_critic_params(key, state_dim, action_dim):
    """nn.Linear-style init, U(-1/sqrt(fan_in), 1/sqrt(fan_in)).

    Weights stored torch-style as (in_features, out_features) applied as x @ W,
    biases as (out_features,)."""
    dims = [(state_dim + action_dim, 128), (128, 64), (64, 1)]
    params = []
    for fan_in, fan_out in dims:
        key, kw, kb = jax.random.split(key, 3)
        bound = float(fan_in) ** -0.5
        w = jax.random.uniform(kw, (fan_in, fan_out), jnp.float32, -bound, bound)
        b = jax.random.uniform(kb, (fan_out,), jnp.float32, -bound, bound)
        params += [w, b]
    return tuple(params)


def prepare_critic_params(params, state_dim, compute_dtype=jnp.bfloat16):
    """One-time conversion of torch-layout params to the kernel layout."""
    w1, b1, w2, b2, w3, b3 = params
    return (
        jnp.asarray(w1[:state_dim].T, compute_dtype),   # w1s: (128, state_dim)
        jnp.asarray(w1[state_dim:].T, compute_dtype),   # w1a: (128, action_dim)
        jnp.asarray(b1, jnp.float32).reshape(-1, 1),    # b1 : (128, 1)
        jnp.asarray(w2.T, compute_dtype),               # w2 : (64, 128)
        jnp.asarray(b2, jnp.float32).reshape(-1, 1),    # b2 : (64, 1)
        jnp.asarray(w3.T, compute_dtype),               # w3 : (1, 64)
        jnp.asarray(b3, jnp.float32).reshape(1, 1),     # b3 : (1, 1) -> SMEM
    )


@functools.partial(jax.jit, static_argnames=("tb",))
def critic_forward(s, a, kparams, *, tb=512):
    """Runs the fused critic MLP; returns q of shape (B, 1) float32."""
    w1s, w1a, b1, w2, b2, w3, b3 = kparams
    B, sd = s.shape
    ad = a.shape[1]
    h1_dim, h2_dim = w1s.shape[0], w2.shape[0]
    dt = w1s.dtype

    n_tiles = pl.cdiv(B, tb)
    b_pad = n_tiles * tb
    # Lane-dense transposed inputs: (features, batch), zero-padded along batch.
    s_t = jnp.pad(s.T.astype(dt), ((0, 0), (0, b_pad - B)))
    a_t = jnp.pad(a.T.astype(dt), ((0, 0), (0, b_pad - B)))

    out_t = pl.pallas_call(
        critic_kernel,
        out_shape=jax.ShapeDtypeStruct((1, b_pad), jnp.float32),
        grid=(n_tiles,),
        in_specs=[
            pl.BlockSpec((sd, tb), lambda i: (0, i)),           # s_t (batch-tiled)
            pl.BlockSpec((ad, tb), lambda i: (0, i)),           # a_t (batch-tiled)
            pl.BlockSpec((h1_dim, sd), lambda i: (0, 0)),       # w1s (resident)
            pl.BlockSpec((h1_dim, ad), lambda i: (0, 0)),       # w1a (resident)
            pl.BlockSpec((h1_dim, 1), lambda i: (0, 0)),        # b1  (resident)
            pl.BlockSpec((h2_dim, h1_dim), lambda i: (0, 0)),   # w2  (resident)
            pl.BlockSpec((h2_dim, 1), lambda i: (0, 0)),        # b2  (resident)
            pl.BlockSpec((1, h2_dim), lambda i: (0, 0)),        # w3  (resident)
            pl.BlockSpec(memory_space=pltpu.MemorySpace.SMEM),  # b3 scalar
        ],
        out_specs=pl.BlockSpec((1, tb), lambda i: (0, i)),
        compiler_params=pltpu.CompilerParams(
            dimension_semantics=("parallel",)),
    )(s_t, a_t, w1s, w1a, b1, w2, b2, w3, b3)

    return out_t[0, :B].reshape(B, 1)   # back to torch's (B, 1)


def critic_reference(s, a, params):
    """Pure-JAX float32 reference matching the PyTorch module."""
    w1, b1, w2, b2, w3, b3 = params
    x = jnp.concatenate([s, a], axis=1)
    h1 = jnp.maximum(x @ w1 + b1, 0.0)
    h2 = jnp.maximum(h1 @ w2 + b2, 0.0)
    return h2 @ w3 + b3


if __name__ == "__main__":
    batch, state_dim, action_dim = 8, 8, 4

    key = jax.random.PRNGKey(0)
    k_s, k_a, k_p, k_s2, k_a2 = jax.random.split(key, 5)
    s = jax.random.normal(k_s, (batch, state_dim), jnp.float32)
    a = jax.random.normal(k_a, (batch, action_dim), jnp.float32)

    params = init_critic_params(k_p, state_dim, action_dim)
    kparams = prepare_critic_params(params, state_dim)

    q = jax.block_until_ready(critic_forward(s, a, kparams))
    q_ref = critic_reference(s, a, params)
    assert q.shape == (batch, 1)
    assert jnp.allclose(q, q_ref, atol=2e-2, rtol=2e-2), "mismatch (small batch)"

    # Exercise the batch grid: multiple tiles + padding of a non-multiple batch.
    big_b = 700
    s2 = jax.random.normal(k_s2, (big_b, state_dim), jnp.float32)
    a2 = jax.random.normal(k_a2, (big_b, action_dim), jnp.float32)
    q2 = jax.block_until_ready(critic_forward(s2, a2, kparams))
    q2_ref = critic_reference(s2, a2, params)
    assert q2.shape == (big_b, 1)
    assert jnp.allclose(q2, q2_ref, atol=2e-2, rtol=2e-2), "mismatch (tiled batch)"

    print("KERNEL_OK")
</pallas_src>

<mosaic_0001>
module attributes {stable_mosaic.version = 11 : i64} {
  func.func @critic_kernel(%arg0: i32, %arg1: memref<8x512xbf16, #tpu.memory_space<vmem>>, %arg2: memref<4x512xbf16, #tpu.memory_space<vmem>>, %arg3: memref<128x8xbf16, #tpu.memory_space<vmem>>, %arg4: memref<128x4xbf16, #tpu.memory_space<vmem>>, %arg5: memref<128x1xf32, #tpu.memory_space<vmem>>, %arg6: memref<64x128xbf16, #tpu.memory_space<vmem>>, %arg7: memref<64x1xf32, #tpu.memory_space<vmem>>, %arg8: memref<1x64xbf16, #tpu.memory_space<vmem>>, %arg9: memref<1x1xf32, #tpu.memory_space<smem>>, %arg10: memref<1x512xf32, #tpu.memory_space<vmem>>) attributes {dimension_semantics = [#tpu.dimension_semantics<parallel>], iteration_bounds = array<i64: 1>, scalar_prefetch = 0 : i64, scratch_operands = 0 : i64, tpu.core_type = #tpu.core_type<tc>, window_params = [{transform_indices = @transform_0, window_bounds = array<i64: 8, 512>}, {transform_indices = @transform_1, window_bounds = array<i64: 4, 512>}, {pipeline_mode = #tpu.pipeline_mode<synchronous>, transform_indices = @transform_2, window_bounds = array<i64: 128, 8>}, {pipeline_mode = #tpu.pipeline_mode<synchronous>, transform_indices = @transform_3, window_bounds = array<i64: 128, 4>}, {pipeline_mode = #tpu.pipeline_mode<synchronous>, transform_indices = @transform_4, window_bounds = array<i64: 128, 1>}, {pipeline_mode = #tpu.pipeline_mode<synchronous>, transform_indices = @transform_5, window_bounds = array<i64: 64, 128>}, {pipeline_mode = #tpu.pipeline_mode<synchronous>, transform_indices = @transform_6, window_bounds = array<i64: 64, 1>}, {pipeline_mode = #tpu.pipeline_mode<synchronous>, transform_indices = @transform_7, window_bounds = array<i64: 1, 64>}, {transform_indices = @transform_8, window_bounds = array<i64: 1, 1>}, {transform_indices = @transform_9, window_bounds = array<i64: 1, 512>}]} {
    %c0 = arith.constant 0 : index
    %c0_0 = arith.constant 0 : index
    %0 = vector.load %arg3[%c0, %c0_0] : memref<128x8xbf16, #tpu.memory_space<vmem>>, vector<128x8xbf16>
    %c0_1 = arith.constant 0 : index
    %c0_2 = arith.constant 0 : index
    %1 = vector.load %arg1[%c0_1, %c0_2] : memref<8x512xbf16, #tpu.memory_space<vmem>>, vector<8x512xbf16>
    %cst = arith.constant dense<0.000000e+00> : vector<128x512xf32>
    %2 = tpu.matmul %0, %1, %cst {dimension_numbers = #tpu.dot_dimension_numbers<[1], [0], [0], [1], [0, 0, 1, 1], [], []>} : vector<128x8xbf16>, vector<8x512xbf16>, vector<128x512xf32> -> vector<128x512xf32>
    %c0_3 = arith.constant 0 : index
    %c0_4 = arith.constant 0 : index
    %3 = vector.load %arg4[%c0_3, %c0_4] : memref<128x4xbf16, #tpu.memory_space<vmem>>, vector<128x4xbf16>
    %c0_5 = arith.constant 0 : index
    %c0_6 = arith.constant 0 : index
    %4 = vector.load %arg2[%c0_5, %c0_6] : memref<4x512xbf16, #tpu.memory_space<vmem>>, vector<4x512xbf16>
    %cst_7 = arith.constant dense<0.000000e+00> : vector<128x512xf32>
    %5 = tpu.matmul %3, %4, %cst_7 {dimension_numbers = #tpu.dot_dimension_numbers<[1], [0], [0], [1], [0, 0, 1, 1], [], []>} : vector<128x4xbf16>, vector<4x512xbf16>, vector<128x512xf32> -> vector<128x512xf32>
    %6 = arith.addf %2, %5 : vector<128x512xf32>
    %c0_8 = arith.constant 0 : index
    %c0_9 = arith.constant 0 : index
    %7 = vector.load %arg5[%c0_8, %c0_9] : memref<128x1xf32, #tpu.memory_space<vmem>>, vector<128x1xf32>
    %8 = vector.broadcast %7 : vector<128x1xf32> to vector<128x512xf32>
    %9 = arith.addf %6, %8 : vector<128x512xf32>
    %cst_10 = arith.constant 0.000000e+00 : f32
    %10 = vector.broadcast %cst_10 : f32 to vector<128x512xf32>
    %11 = arith.maximumf %9, %10 : vector<128x512xf32>
    %c0_11 = arith.constant 0 : index
    %c0_12 = arith.constant 0 : index
    %12 = vector.load %arg6[%c0_11, %c0_12] : memref<64x128xbf16, #tpu.memory_space<vmem>>, vector<64x128xbf16>
    %13 = arith.truncf %11 : vector<128x512xf32> to vector<128x512xbf16>
    %cst_13 = arith.constant dense<0.000000e+00> : vector<64x512xf32>
    %14 = tpu.matmul %12, %13, %cst_13 {dimension_numbers = #tpu.dot_dimension_numbers<[1], [0], [0], [1], [0, 0, 1, 1], [], []>} : vector<64x128xbf16>, vector<128x512xbf16>, vector<64x512xf32> -> vector<64x512xf32>
    %c0_14 = arith.constant 0 : index
    %c0_15 = arith.constant 0 : index
    %15 = vector.load %arg7[%c0_14, %c0_15] : memref<64x1xf32, #tpu.memory_space<vmem>>, vector<64x1xf32>
    %16 = vector.broadcast %15 : vector<64x1xf32> to vector<64x512xf32>
    %17 = arith.addf %14, %16 : vector<64x512xf32>
    %cst_16 = arith.constant 0.000000e+00 : f32
    %18 = vector.broadcast %cst_16 : f32 to vector<64x512xf32>
    %19 = arith.maximumf %17, %18 : vector<64x512xf32>
    %c0_17 = arith.constant 0 : index
    %c0_18 = arith.constant 0 : index
    %20 = vector.load %arg8[%c0_17, %c0_18] : memref<1x64xbf16, #tpu.memory_space<vmem>>, vector<1x64xbf16>
    %21 = arith.truncf %19 : vector<64x512xf32> to vector<64x512xbf16>
    %cst_19 = arith.constant dense<0.000000e+00> : vector<1x512xf32>
    %22 = tpu.matmul %20, %21, %cst_19 {dimension_numbers = #tpu.dot_dimension_numbers<[1], [0], [0], [1], [0, 0, 1, 1], [], []>} : vector<1x64xbf16>, vector<64x512xbf16>, vector<1x512xf32> -> vector<1x512xf32>
    %c0_20 = arith.constant 0 : index
    %c0_21 = arith.constant 0 : index
    %23 = memref.load %arg9[%c0_20, %c0_21] : memref<1x1xf32, #tpu.memory_space<smem>>
    %24 = vector.broadcast %23 : f32 to vector<1x512xf32>
    %25 = arith.addf %22, %24 : vector<1x512xf32>
    %c0_22 = arith.constant 0 : index
    %c0_23 = arith.constant 0 : index
    %26 = vector.load %arg10[%c0_22, %c0_23] : memref<1x512xf32, #tpu.memory_space<vmem>>, vector<1x512xf32>
    tpu.vector_store %arg10[%c0_22, %c0_23], %25 {strides = array<i32>} : memref<1x512xf32, #tpu.memory_space<vmem>>, vector<1x512xf32>,
    return
  }
  func.func @transform_0(%arg0: i32) -> (i32, i32) {
    %c0_i32 = arith.constant 0 : i32
    %c0_i32_0 = arith.constant 0 : i32
    return %c0_i32, %arg0 : i32, i32
  }
  func.func @transform_1(%arg0: i32) -> (i32, i32) {
    %c0_i32 = arith.constant 0 : i32
    %c0_i32_0 = arith.constant 0 : i32
    return %c0_i32, %arg0 : i32, i32
  }
  func.func @transform_2(%arg0: i32) -> (i32, i32) {
    %c0_i32 = arith.constant 0 : i32
    %c0_i32_0 = arith.constant 0 : i32
    %c0_i32_1 = arith.constant 0 : i32
    return %c0_i32, %c0_i32_0 : i32, i32
  }
  func.func @transform_3(%arg0: i32) -> (i32, i32) {
    %c0_i32 = arith.constant 0 : i32
    %c0_i32_0 = arith.constant 0 : i32
    %c0_i32_1 = arith.constant 0 : i32
    return %c0_i32, %c0_i32_0 : i32, i32
  }
  func.func @transform_4(%arg0: i32) -> (i32, i32) {
    %c0_i32 = arith.constant 0 : i32
    %c0_i32_0 = arith.constant 0 : i32
    %c0_i32_1 = arith.constant 0 : i32
    return %c0_i32, %c0_i32_0 : i32, i32
  }
  func.func @transform_5(%arg0: i32) -> (i32, i32) {
    %c0_i32 = arith.constant 0 : i32
    %c0_i32_0 = arith.constant 0 : i32
    %c0_i32_1 = arith.constant 0 : i32
    return %c0_i32, %c0_i32_0 : i32, i32
  }
  func.func @transform_6(%arg0: i32) -> (i32, i32) {
    %c0_i32 = arith.constant 0 : i32
    %c0_i32_0 = arith.constant 0 : i32
    %c0_i32_1 = arith.constant 0 : i32
    return %c0_i32, %c0_i32_0 : i32, i32
  }
  func.func @transform_7(%arg0: i32) -> (i32, i32) {
    %c0_i32 = arith.constant 0 : i32
    %c0_i32_0 = arith.constant 0 : i32
    %c0_i32_1 = arith.constant 0 : i32
    return %c0_i32, %c0_i32_0 : i32, i32
  }
  func.func @transform_8(%arg0: i32) -> (i32, i32) {
    %c0_i32 = arith.constant 0 : i32
    %c0_i32_0 = arith.constant 0 : i32
    %c0_i32_1 = arith.constant 0 : i32
    return %c0_i32, %c0_i32_0 : i32, i32
  }
  func.func @transform_9(%arg0: i32) -> (i32, i32) {
    %c0_i32 = arith.constant 0 : i32
    %c0_i32_0 = arith.constant 0 : i32
    return %c0_i32, %arg0 : i32, i32
  }
}

</mosaic_0001>

<llo_original>
// kernel: critic_forward.1
$region0: #{critic_forward.1}
  #allocation0 [shape = 'u32[]', space=smem, size = 0x4, offset = 0x4, fixed_abs, tag = 'smem constant byte address 0x4 - core index']
  #allocation1 [shape = 'u32[144,128]{1,0:T(1,128)}', space=vmem, size = 0x12000, scoped, tag = 'internal scratch']
  #allocation2 [shape = 'f32[1,1]{1,0:T(1,128)S(6)}', space=smem, size = 0x200, scoped, tag = 'scoped memory for critic_forward.1']
  %s0 = inlined_call_operand.vmem [shape: bf16[8,512], index: 0, kind: input, shape index: {}]
  %s1 = inlined_call_operand.vmem [shape: bf16[4,512], index: 1, kind: input, shape index: {}]
  %s2 = inlined_call_operand.vmem [shape: bf16[128,8], index: 2, kind: input, shape index: {}]
  %s3 = inlined_call_operand.vmem [shape: bf16[128,4], index: 3, kind: input, shape index: {}]
  %s4 = inlined_call_operand.vmem [shape: f32[128,1], index: 4, kind: input, shape index: {}]
  %s5 = inlined_call_operand.vmem [shape: bf16[64,128], index: 5, kind: input, shape index: {}]
  %s6 = inlined_call_operand.vmem [shape: f32[64,1], index: 6, kind: input, shape index: {}]
  %s7 = inlined_call_operand.vmem [shape: bf16[1,64], index: 7, kind: input, shape index: {}]
  %s8 = inlined_call_operand.<no memory space> [shape: f32[1,1], index: 8, kind: input, shape index: {}]
  %s9 = inlined_call_operand.vmem [shape: f32[1,512], index: 9, kind: output, shape index: {}]
  %s10 = sld [smem:[#allocation0]]
  $region46: #{critic_forward.1} parent=0
    _
  %s12 = ssub.s32 1, %s10
  %s13 = scalar_select 0, %s12, %s10
  %14 = sst [smem:[#allocation2]] %s8
  // Predicated region
  $region2: #{critic_forward.1} parent=0 // pred_check
    _
  $region3: #{critic_forward.1} parent=0 // pred_check_branch
    %16 = sbr.rel (0) target = $region5
  $region4: #{critic_forward.1} parent=0 // pred_region
    _
  $region5: #{critic_forward.1} parent=0 // pred_fallthru
    _
  // Predicated region
  $region6: #{critic_forward.1} parent=0 // pred_check
    _
  $region7: #{critic_forward.1} parent=0 // pred_check_branch
    %18 = sbr.rel (0) target = $region9
  $region8: #{critic_forward.1} parent=0 // pred_region
    _
  $region9: #{critic_forward.1} parent=0 // pred_fallthru
    _
  // Predicated region
  $region10: #{critic_forward.1} parent=0 // pred_check
    _
  $region11: #{critic_forward.1} parent=0 // pred_check_branch
    %20 = sbr.rel (0) target = $region13
  $region12: #{critic_forward.1} parent=0 // pred_region
    _
  $region13: #{critic_forward.1} parent=0 // pred_fallthru
    _
  // Predicated region
  $region14: #{critic_forward.1} parent=0 // pred_check
    _
  $region15: #{critic_forward.1} parent=0 // pred_check_branch
    %22 = sbr.rel (0) target = $region17
  $region16: #{critic_forward.1} parent=0 // pred_region
    _
  $region17: #{critic_forward.1} parent=0 // pred_fallthru
    _
  // Predicated region
  $region18: #{critic_forward.1} parent=0 // pred_check
    _
  $region19: #{critic_forward.1} parent=0 // pred_check_branch
    %24 = sbr.rel (0) target = $region21
  $region20: #{critic_forward.1} parent=0 // pred_region
    _
  $region21: #{critic_forward.1} parent=0 // pred_fallthru
    _
  // Predicated region
  $region22: #{critic_forward.1} parent=0 // pred_check
    _
  $region23: #{critic_forward.1} parent=0 // pred_check_branch
    %26 = sbr.rel (0) target = $region25
  $region24: #{critic_forward.1} parent=0 // pred_region
    _
  $region25: #{critic_forward.1} parent=0 // pred_fallthru
    _
  // Predicated region
  $region26: #{critic_forward.1} parent=0 // pred_check
    _
  $region27: #{critic_forward.1} parent=0 // pred_check_branch
    %28 = sbr.rel (0) target = $region29
  $region28: #{critic_forward.1} parent=0 // pred_region
    _
  $region29: #{critic_forward.1} parent=0 // pred_fallthru
    _
  // Predicated region
  $region30: #{critic_forward.1} parent=0 // pred_check
    _
  $region31: #{critic_forward.1} parent=0 // pred_check_branch
    %30 = sbr.rel (0) target = $region33
  $region32: #{critic_forward.1} parent=0 // pred_region
    _
  $region33: #{critic_forward.1} parent=0 // pred_fallthru
    _
  // Predicated region
  $region34: #{critic_forward.1} parent=0 // pred_check
    _
  $region35: #{critic_forward.1} parent=0 // pred_check_branch
    %32 = sbr.rel (0) target = $region37
  $region36: #{critic_forward.1} parent=0 // pred_region
    _
  $region37: #{critic_forward.1} parent=0 // pred_fallthru
    _
  %v34 = vld [vmem:[%s2] sm:$0xf]
  %v35 = vld [vmem:[%s2 + $0x4] sm:$0xf]
  %v36 = vld [vmem:[%s2 + $0x8] sm:$0xf]
  %v37 = vld [vmem:[%s2 + $0xc] sm:$0xf]
  %v38 = vld [vmem:[%s2 + $0x10] sm:$0xf]
  %v39 = vld [vmem:[%s2 + $0x14] sm:$0xf]
  %v40 = vld [vmem:[%s2 + $0x18] sm:$0xf]
  %v41 = vld [vmem:[%s2 + $0x1c] sm:$0xf]
  %v42 = vld [vmem:[%s2 + $0x20] sm:$0xf]
  %v43 = vld [vmem:[%s2 + $0x24] sm:$0xf]
  %v44 = vld [vmem:[%s2 + $0x28] sm:$0xf]
  %v45 = vld [vmem:[%s2 + $0x2c] sm:$0xf]
  %v46 = vld [vmem:[%s2 + $0x30] sm:$0xf]
  %v47 = vld [vmem:[%s2 + $0x34] sm:$0xf]
  %v48 = vld [vmem:[%s2 + $0x38] sm:$0xf]
  %v49 = vld [vmem:[%s2 + $0x3c] sm:$0xf]
  %v50 = vld [vmem:[%s0] sm:$0xff]
  %v51 = vld [vmem:[%s0 + $0x8] sm:$0xff]
  %v52 = vld [vmem:[%s3] sm:$0xf]
  %v53 = vld [vmem:[%s3 + $0x4] sm:$0xf]
  %v54 = vld [vmem:[%s3 + $0x8] sm:$0xf]
  %v55 = vld [vmem:[%s3 + $0xc] sm:$0xf]
  %v56 = vld [vmem:[%s3 + $0x10] sm:$0xf]
  %v57 = vld [vmem:[%s3 + $0x14] sm:$0xf]
  %v58 = vld [vmem:[%s3 + $0x18] sm:$0xf]
  %v59 = vld [vmem:[%s3 + $0x1c] sm:$0xf]
  %v60 = vld [vmem:[%s3 + $0x20] sm:$0xf]
  %v61 = vld [vmem:[%s3 + $0x24] sm:$0xf]
  %v62 = vld [vmem:[%s3 + $0x28] sm:$0xf]
  %v63 = vld [vmem:[%s3 + $0x2c] sm:$0xf]
  %v64 = vld [vmem:[%s3 + $0x30] sm:$0xf]
  %v65 = vld [vmem:[%s3 + $0x34] sm:$0xf]
  %v66 = vld [vmem:[%s3 + $0x38] sm:$0xf]
  %v67 = vld [vmem:[%s3 + $0x3c] sm:$0xf]
  %v68 = vld [vmem:[%s1] sm:$0xff]
  %v85 = vunpack.c.l.b16 %v52
  %v86 = vunpack.c.l.b16 %v53
  %v87 = vunpack.c.l.b16 %v54
  %v88 = vunpack.c.l.b16 %v55
  %v89 = vunpack.c.l.b16 %v56
  %v90 = vunpack.c.l.b16 %v57
  %v91 = vunpack.c.l.b16 %v58
  %v92 = vunpack.c.l.b16 %v59
  %v93 = vunpack.c.l.b16 %v60
  %v94 = vunpack.c.l.b16 %v61
  %v95 = vunpack.c.l.b16 %v62
  %v96 = vunpack.c.l.b16 %v63
  %v97 = vunpack.c.l.b16 %v64
  %v98 = vunpack.c.l.b16 %v65
  %v99 = vunpack.c.l.b16 %v66
  %v100 = vunpack.c.l.b16 %v67
  %v101 = vpack.c.b16 %v86, %v85
  %v102 = vpack.c.b16 %v88, %v87
  %v103 = vpack.c.b16 %v90, %v89
  %v104 = vpack.c.b16 %v92, %v91
  %v105 = vpack.c.b16 %v94, %v93
  %v106 = vpack.c.b16 %v96, %v95
  %v107 = vpack.c.b16 %v98, %v97
  %v108 = vpack.c.b16 %v100, %v99
  %v110 = vcombine.high %v68, %v68
  %v112 = vunpack.c.l.s4 1983009808
  %v113 = vunpack.c.0.s8 %v112
  %v114 = vlaneseq
  %v115 = vshrl.u32 %v114, 7
  %v116 = vsub.s32 %v113, %v115
  %v117 = vrot.slane %v68, %v116
  %v119 = vunpack.c.l.s4 1983009808
  %v120 = vunpack.c.0.s8 %v119
  %v121 = vlaneseq
  %v122 = vshrl.u32 %v121, 7
  %v123 = vsub.s32 %v120, %v122
  %v124 = vrot.slane %v110, %v123
  %v125 = vcombine.high %v117, %v117
  %v126 = vcombine.high %v124, %v124
  %vm127 = vcmask 31744
  %v129 = vsel %vm127, %v101, 0
  %v132 = vsel %vm127, %v102, 0
  %v135 = vsel %vm127, %v103, 0
  %v138 = vsel %vm127, %v104, 0
  %v141 = vsel %vm127, %v105, 0
  %v144 = vsel %vm127, %v106, 0
  %v147 = vsel %vm127, %v107, 0
  %v150 = vsel %vm127, %v108, 0
  %vm152 = vcmask 1041408
  %v154 = vsel %vm152, %v117, 0
  %v157 = vsel %vm152, %v125, 0
  %v160 = vsel %vm152, %v124, 0
  %v163 = vsel %vm152, %v126, 0
  %165 = vmatprep.subr.bf16.mxu0 %v157
  %166 = vmatpush1.bf16.msra.mxu0 %v154
  %167 = vmatprep.subr.bf16.mxu0 0
  %168 = vmatpush1.bf16.msra.mxu0 0
  %169 = vmatprep.subr.bf16.mxu0 0
  %170 = vmatpush1.bf16.msra.mxu0 0
  %171 = vmatprep.subr.bf16.mxu0 0
  %172 = vmatpush1.bf16.msra.mxu0 0
  %173 = vmatprep.subr.bf16.mxu0 0
  %174 = vmatpush1.bf16.msra.mxu0 0
  %175 = vmatprep.subr.bf16.mxu0 0
  %176 = vmatpush1.bf16.msra.mxu0 0
  %177 = vmatprep.subr.bf16.mxu0 0
  %178 = vmatpush1.bf16.msra.mxu0 0
  %179 = vmatprep.subr.bf16.mxu0 0
  %180 = vmatpush1.bf16.msra.mxu0 0
  %181 = vmatprep.subr.bf16.mxu0 0
  %182 = vmatpush1.bf16.msra.mxu0 0
  %183 = vmatprep.subr.bf16.mxu0 0
  %184 = vmatpush1.bf16.msra.mxu0 0
  %185 = vmatprep.subr.bf16.mxu0 0
  %186 = vmatpush1.bf16.msra.mxu0 0
  %187 = vmatprep.subr.bf16.mxu0 0
  %188 = vmatpush1.bf16.msra.mxu0 0
  %189 = vmatprep.subr.bf16.mxu0 0
  %190 = vmatpush1.bf16.msra.mxu0 0
  %191 = vmatprep.subr.bf16.mxu0 0
  %192 = vmatpush1.bf16.msra.mxu0 0
  %193 = vmatprep.subr.bf16.mxu0 0
  %194 = vmatpush1.bf16.msra.mxu0 0
  %195 = vmatprep.subr.bf16.mxu0 0
  %196 = vmatpush1.bf16.msra.mxu0 0
  %197 = vmatprep.mubr.bf16.mxu0 0
  %198 = vmatmul.mubr.bf16.gmra.mrb[0].mxu0 %v129
  %v199 = vpop.f32.mrb[0].mxu0
  %v200 = vadd.f32 0.0, %v199
  %v201 = vpop.f32.mrb[0].mxu0
  %v202 = vadd.f32 0.0, %v201
  %v203 = vpop.f32.mrb[0].mxu0
  %v204 = vadd.f32 0.0, %v203
  %v205 = vpop.f32.mrb[0].mxu0
  %v206 = vadd.f32 0.0, %v205
  %207 = vmatprep.mubr.bf16.mxu0 0
  %208 = vmatmul.mubr.bf16.gmra.mrb[0].mxu0 %v132
  %v209 = vpop.f32.mrb[0].mxu0
  %v210 = vadd.f32 0.0, %v209
  %v211 = vpop.f32.mrb[0].mxu0
  %v212 = vadd.f32 0.0, %v211
  %v213 = vpop.f32.mrb[0].mxu0
  %v214 = vadd.f32 0.0, %v213
  %v215 = vpop.f32.mrb[0].mxu0
  %v216 = vadd.f32 0.0, %v215
  %217 = vmatprep.mubr.bf16.mxu0 0
  %218 = vmatmul.mubr.bf16.gmra.mrb[0].mxu0 %v135
  %v219 = vpop.f32.mrb[0].mxu0
  %v220 = vadd.f32 0.0, %v219
  %v221 = vpop.f32.mrb[0].mxu0
  %v222 = vadd.f32 0.0, %v221
  %v223 = vpop.f32.mrb[0].mxu0
  %v224 = vadd.f32 0.0, %v223
  %v225 = vpop.f32.mrb[0].mxu0
  %v226 = vadd.f32 0.0, %v225
  %227 = vmatprep.mubr.bf16.mxu0 0
  %228 = vmatmul.mubr.bf16.gmra.mrb[0].mxu0 %v138
  %v229 = vpop.f32.mrb[0].mxu0
  %v230 = vadd.f32 0.0, %v229
  %v231 = vpop.f32.mrb[0].mxu0
  %v232 = vadd.f32 0.0, %v231
  %v233 = vpop.f32.mrb[0].mxu0
  %v234 = vadd.f32 0.0, %v233
  %v235 = vpop.f32.mrb[0].mxu0
  %v236 = vadd.f32 0.0, %v235
  %237 = vmatprep.mubr.bf16.mxu0 0
  %238 = vmatmul.mubr.bf16.gmra.mrb[0].mxu0 %v141
  %v239 = vpop.f32.mrb[0].mxu0
  %v240 = vadd.f32 0.0, %v239
  %v241 = vpop.f32.mrb[0].mxu0
  %v242 = vadd.f32 0.0, %v241
  %v243 = vpop.f32.mrb[0].mxu0
  %v244 = vadd.f32 0.0, %v243
  %v245 = vpop.f32.mrb[0].mxu0
  %v246 = vadd.f32 0.0, %v245
  %247 = vmatprep.mubr.bf16.mxu0 0
  %248 = vmatmul.mubr.bf16.gmra.mrb[0].mxu0 %v144
  %v249 = vpop.f32.mrb[0].mxu0
  %v250 = vadd.f32 0.0, %v249
  %v251 = vpop.f32.mrb[0].mxu0
  %v252 = vadd.f32 0.0, %v251
  %v253 = vpop.f32.mrb[0].mxu0
  %v254 = vadd.f32 0.0, %v253
  %v255 = vpop.f32.mrb[0].mxu0
  %v256 = vadd.f32 0.0, %v255
  %257 = vmatprep.mubr.bf16.mxu0 0
  %258 = vmatmul.mubr.bf16.gmra.mrb[0].mxu0 %v147
  %v259 = vpop.f32.mrb[0].mxu0
  %v260 = vadd.f32 0.0, %v259
  %v261 = vpop.f32.mrb[0].mxu0
  %v262 = vadd.f32 0.0, %v261
  %v263 = vpop.f32.mrb[0].mxu0
  %v264 = vadd.f32 0.0, %v263
  %v265 = vpop.f32.mrb[0].mxu0
  %v266 = vadd.f32 0.0, %v265
  %267 = vmatprep.mubr.bf16.mxu0 0
  %268 = vmatmul.mubr.bf16.gmra.mrb[0].mxu0 %v150
  %v269 = vpop.f32.mrb[0].mxu0
  %v270 = vadd.f32 0.0, %v269
  %v271 = vpop.f32.mrb[0].mxu0
  %v272 = vadd.f32 0.0, %v271
  %v273 = vpop.f32.mrb[0].mxu0
  %v274 = vadd.f32 0.0, %v273
  %v275 = vpop.f32.mrb[0].mxu0
  %v276 = vadd.f32 0.0, %v275
  %277 = vdwg.mxu0
  %278 = vmatprep.subr.bf16.mxu0 %v163
  %279 = vmatpush1.bf16.msra.mxu0 %v160
  %280 = vmatprep.subr.bf16.mxu0 0
  %281 = vmatpush1.bf16.msra.mxu0 0
  %282 = vmatprep.subr.bf16.mxu0 0
  %283 = vmatpush1.bf16.msra.mxu0 0
  %284 = vmatprep.subr.bf16.mxu0 0
  %285 = vmatpush1.bf16.msra.mxu0 0
  %286 = vmatprep.subr.bf16.mxu0 0
  %287 = vmatpush1.bf16.msra.mxu0 0
  %288 = vmatprep.subr.bf16.mxu0 0
  %289 = vmatpush1.bf16.msra.mxu0 0
  %290 = vmatprep.subr.bf16.mxu0 0
  %291 = vmatpush1.bf16.msra.mxu0 0
  %292 = vmatprep.subr.bf16.mxu0 0
  %293 = vmatpush1.bf16.msra.mxu0 0
  %294 = vmatprep.subr.bf16.mxu0 0
  %295 = vmatpush1.bf16.msra.mxu0 0
  %296 = vmatprep.subr.bf16.mxu0 0
  %297 = vmatpush1.bf16.msra.mxu0 0
  %298 = vmatprep.subr.bf16.mxu0 0
  %299 = vmatpush1.bf16.msra.mxu0 0
  %300 = vmatprep.subr.bf16.mxu0 0
  %301 = vmatpush1.bf16.msra.mxu0 0
  %302 = vmatprep.subr.bf16.mxu0 0
  %303 = vmatpush1.bf16.msra.mxu0 0
  %304 = vmatprep.subr.bf16.mxu0 0
  %305 = vmatpush1.bf16.msra.mxu0 0
  %306 = vmatprep.subr.bf16.mxu0 0
  %307 = vmatpush1.bf16.msra.mxu0 0
  %308 = vmatprep.subr.bf16.mxu0 0
  %309 = vmatpush1.bf16.msra.mxu0 0
  %310 = vmatprep.mubr.bf16.mxu0 0
  %311 = vmatmul.mubr.bf16.gmra.mrb[0].mxu0 %v129
  %v312 = vpop.f32.mrb[0].mxu0
  %v313 = vadd.f32 0.0, %v312
  %v314 = vpop.f32.mrb[0].mxu0
  %v315 = vadd.f32 0.0, %v314
  %v316 = vpop.f32.mrb[0].mxu0
  %v317 = vadd.f32 0.0, %v316
  %v318 = vpop.f32.mrb[0].mxu0
  %v319 = vadd.f32 0.0, %v318
  %320 = vmatprep.mubr.bf16.mxu0 0
  %321 = vmatmul.mubr.bf16.gmra.mrb[0].mxu0 %v132
  %v322 = vpop.f32.mrb[0].mxu0
  %v323 = vadd.f32 0.0, %v322
  %v324 = vpop.f32.mrb[0].mxu0
  %v325 = vadd.f32 0.0, %v324
  %v326 = vpop.f32.mrb[0].mxu0
  %v327 = vadd.f32 0.0, %v326
  %v328 = vpop.f32.mrb[0].mxu0
  %v329 = vadd.f32 0.0, %v328
  %330 = vmatprep.mubr.bf16.mxu0 0
  %331 = vmatmul.mubr.bf16.gmra.mrb[0].mxu0 %v135
  %v332 = vpop.f32.mrb[0].mxu0
  %v333 = vadd.f32 0.0, %v332
  %v334 = vpop.f32.mrb[0].mxu0
  %v335 = vadd.f32 0.0, %v334
  %v336 = vpop.f32.mrb[0].mxu0
  %v337 = vadd.f32 0.0, %v336
  %v338 = vpop.f32.mrb[0].mxu0
  %v339 = vadd.f32 0.0, %v338
  %340 = vmatprep.mubr.bf16.mxu0 0
  %341 = vmatmul.mubr.bf16.gmra.mrb[0].mxu0 %v138
  %v342 = vpop.f32.mrb[0].mxu0
  %v343 = vadd.f32 0.0, %v342
  %v344 = vpop.f32.mrb[0].mxu0
  %v345 = vadd.f32 0.0, %v344
  %v346 = vpop.f32.mrb[0].mxu0
  %v347 = vadd.f32 0.0, %v346
  %v348 = vpop.f32.mrb[0].mxu0
  %v349 = vadd.f32 0.0, %v348
  %350 = vmatprep.mubr.bf16.mxu0 0
  %351 = vmatmul.mubr.bf16.gmra.mrb[0].mxu0 %v141
  %v352 = vpop.f32.mrb[0].mxu0
  %v353 = vadd.f32 0.0, %v352
  %v354 = vpop.f32.mrb[0].mxu0
  %v355 = vadd.f32 0.0, %v354
  %v356 = vpop.f32.mrb[0].mxu0
  %v357 = vadd.f32 0.0, %v356
  %v358 = vpop.f32.mrb[0].mxu0
  %v359 = vadd.f32 0.0, %v358
  %360 = vmatprep.mubr.bf16.mxu0 0
  %361 = vmatmul.mubr.bf16.gmra.mrb[0].mxu0 %v144
  %v362 = vpop.f32.mrb[0].mxu0
  %v363 = vadd.f32 0.0, %v362
  %v364 = vpop.f32.mrb[0].mxu0
  %v365 = vadd.f32 0.0, %v364
  %v366 = vpop.f32.mrb[0].mxu0
  %v367 = vadd.f32 0.0, %v366
  %v368 = vpop.f32.mrb[0].mxu0
  %v369 = vadd.f32 0.0, %v368
  %370 = vmatprep.mubr.bf16.mxu0 0
  %371 = vmatmul.mubr.bf16.gmra.mrb[0].mxu0 %v147
  %v372 = vpop.f32.mrb[0].mxu0
  %v373 = vadd.f32 0.0, %v372
  %v374 = vpop.f32.mrb[0].mxu0
  %v375 = vadd.f32 0.0, %v374
  %v376 = vpop.f32.mrb[0].mxu0
  %v377 = vadd.f32 0.0, %v376
  %v378 = vpop.f32.mrb[0].mxu0
  %v379 = vadd.f32 0.0, %v378
  %380 = vmatprep.mubr.bf16.mxu0 0
  %381 = vmatmul.mubr.bf16.gmra.mrb[0].mxu0 %v150
  %v382 = vpop.f32.mrb[0].mxu0
  %v383 = vadd.f32 0.0, %v382
  %v384 = vpop.f32.mrb[0].mxu0
  %v385 = vadd.f32 0.0, %v384
  %v386 = vpop.f32.mrb[0].mxu0
  %v387 = vadd.f32 0.0, %v386
  %v388 = vpop.f32.mrb[0].mxu0
  %v389 = vadd.f32 0.0, %v388
  %390 = vdwg.mxu0
  %v407 = vunpack.c.l.b16 %v34
  %v408 = vunpack.c.l.b16 %v35
  %v409 = vunpack.c.l.b16 %v36
  %v410 = vunpack.c.l.b16 %v37
  %v411 = vunpack.c.l.b16 %v38
  %v412 = vunpack.c.l.b16 %v39
  %v413 = vunpack.c.l.b16 %v40
  %v414 = vunpack.c.l.b16 %v41
  %v415 = vunpack.c.l.b16 %v42
  %v416 = vunpack.c.l.b16 %v43
  %v417 = vunpack.c.l.b16 %v44
  %v418 = vunpack.c.l.b16 %v45
  %v419 = vunpack.c.l.b16 %v46
  %v420 = vunpack.c.l.b16 %v47
  %v421 = vunpack.c.l.b16 %v48
  %v422 = vunpack.c.l.b16 %v49
  %v423 = vpack.c.b16 %v408, %v407
  %v424 = vpack.c.b16 %v410, %v409
  %v425 = vpack.c.b16 %v412, %v411
  %v426 = vpack.c.b16 %v414, %v413
  %v427 = vpack.c.b16 %v416, %v415
  %v428 = vpack.c.b16 %v418, %v417
  %v429 = vpack.c.b16 %v420, %v419
  %v430 = vpack.c.b16 %v422, %v421
  %v433 = vunpack.c.l.b16 %v50
  %v434 = vunpack.c.h.b16 %v50
  %v435 = vunpack.c.l.b16 %v51
  %v436 = vunpack.c.h.b16 %v51
  %v437 = vpack.c.b16 %v433, %v433
  %v438 = vpack.c.b16 %v434, %v434
  %v439 = vpack.c.b16 %v435, %v435
  %v440 = vpack.c.b16 %v436, %v436
  %vm441 = vcmask 64512
  %v443 = vsel %vm441, %v423, 0
  %v446 = vsel %vm441, %v424, 0
  %v449 = vsel %vm441, %v425, 0
  %v452 = vsel %vm441, %v426, 0
  %v455 = vsel %vm441, %v427, 0
  %v458 = vsel %vm441, %v428, 0
  %v461 = vsel %vm441, %v429, 0
  %v464 = vsel %vm441, %v430, 0
  %vm466 = vcmask 1043456
  %v468 = vsel %vm466, %v437, 0
  %v471 = vsel %vm466, %v438, 0
  %v474 = vsel %vm466, %v439, 0
  %v477 = vsel %vm466, %v440, 0
  %479 = vmatprep.subr.bf16.mxu0 %v471
  %480 = vmatpush1.bf16.msra.mxu0 %v468
  %481 = vmatprep.subr.bf16.mxu0 0
  %482 = vmatpush1.bf16.msra.mxu0 0
  %483 = vmatprep.subr.bf16.mxu0 0
  %484 = vmatpush1.bf16.msra.mxu0 0
  %485 = vmatprep.subr.bf16.mxu0 0
  %486 = vmatpush1.bf16.msra.mxu0 0
  %487 = vmatprep.subr.bf16.mxu0 0
  %488 = vmatpush1.bf16.msra.mxu0 0
  %489 = vmatprep.subr.bf16.mxu0 0
  %490 = vmatpush1.bf16.msra.mxu0 0
  %491 = vmatprep.subr.bf16.mxu0 0
  %492 = vmatpush1.bf16.msra.mxu0 0
  %493 = vmatprep.subr.bf16.mxu0 0
  %494 = vmatpush1.bf16.msra.mxu0 0
  %495 = vmatprep.subr.bf16.mxu0 0
  %496 = vmatpush1.bf16.msra.mxu0 0
  %497 = vmatprep.subr.bf16.mxu0 0
  %498 = vmatpush1.bf16.msra.mxu0 0
  %499 = vmatprep.subr.bf16.mxu0 0
  %500 = vmatpush1.bf16.msra.mxu0 0
  %501 = vmatprep.subr.bf16.mxu0 0
  %502 = vmatpush1.bf16.msra.mxu0 0
  %503 = vmatprep.subr.bf16.mxu0 0
  %504 = vmatpush1.bf16.msra.mxu0 0
  %505 = vmatprep.subr.bf16.mxu0 0
  %506 = vmatpush1.bf16.msra.mxu0 0
  %507 = vmatprep.subr.bf16.mxu0 0
  %508 = vmatpush1.bf16.msra.mxu0 0
  %509 = vmatprep.subr.bf16.mxu0 0
  %510 = vmatpush1.bf16.msra.mxu0 0
  %511 = vmatprep.mubr.bf16.mxu0 0
  %512 = vmatmul.mubr.bf16.gmra.mrb[0].mxu0 %v443
  %v513 = vpop.f32.mrb[0].mxu0
  %v514 = vadd.f32 %v200, %v513
  %v515 = vpop.f32.mrb[0].mxu0
  %v516 = vadd.f32 %v202, %v515
  %v517 = vpop.f32.mrb[0].mxu0
  %v518 = vadd.f32 %v204, %v517
  %v519 = vpop.f32.mrb[0].mxu0
  %v520 = vadd.f32 %v206, %v519
  %521 = vmatprep.mubr.bf16.mxu0 0
  %522 = vmatmul.mubr.bf16.gmra.mrb[0].mxu0 %v446
  %v523 = vpop.f32.mrb[0].mxu0
  %v524 = vadd.f32 %v210, %v523
  %v525 = vpop.f32.mrb[0].mxu0
  %v526 = vadd.f32 %v212, %v525
  %v527 = vpop.f32.mrb[0].mxu0
  %v528 = vadd.f32 %v214, %v527
  %v529 = vpop.f32.mrb[0].mxu0
  %v530 = vadd.f32 %v216, %v529
  %531 = vmatprep.mubr.bf16.mxu0 0
  %532 = vmatmul.mubr.bf16.gmra.mrb[0].mxu0 %v449
  %v533 = vpop.f32.mrb[0].mxu0
  %v534 = vadd.f32 %v220, %v533
  %v535 = vpop.f32.mrb[0].mxu0
  %v536 = vadd.f32 %v222, %v535
  %v537 = vpop.f32.mrb[0].mxu0
  %v538 = vadd.f32 %v224, %v537
  %v539 = vpop.f32.mrb[0].mxu0
  %v540 = vadd.f32 %v226, %v539
  %541 = vmatprep.mubr.bf16.mxu0 0
  %542 = vmatmul.mubr.bf16.gmra.mrb[0].mxu0 %v452
  %v543 = vpop.f32.mrb[0].mxu0
  %v544 = vadd.f32 %v230, %v543
  %v545 = vpop.f32.mrb[0].mxu0
  %v546 = vadd.f32 %v232, %v545
  %v547 = vpop.f32.mrb[0].mxu0
  %v548 = vadd.f32 %v234, %v547
  %v549 = vpop.f32.mrb[0].mxu0
  %v550 = vadd.f32 %v236, %v549
  %551 = vmatprep.mubr.bf16.mxu0 0
  %552 = vmatmul.mubr.bf16.gmra.mrb[0].mxu0 %v455
  %v553 = vpop.f32.mrb[0].mxu0
  %v554 = vadd.f32 %v240, %v553
  %v555 = vpop.f32.mrb[0].mxu0
  %v556 = vadd.f32 %v242, %v555
  %v557 = vpop.f32.mrb[0].mxu0
  %v558 = vadd.f32 %v244, %v557
  %v559 = vpop.f32.mrb[0].mxu0
  %v560 = vadd.f32 %v246, %v559
  %561 = vmatprep.mubr.bf16.mxu0 0
  %562 = vmatmul.mubr.bf16.gmra.mrb[0].mxu0 %v458
  %v563 = vpop.f32.mrb[0].mxu0
  %v564 = vadd.f32 %v250, %v563
  %v565 = vpop.f32.mrb[0].mxu0
  %v566 = vadd.f32 %v252, %v565
  %v567 = vpop.f32.mrb[0].mxu0
  %v568 = vadd.f32 %v254, %v567
  %v569 = vpop.f32.mrb[0].mxu0
  %v570 = vadd.f32 %v256, %v569
  %571 = vmatprep.mubr.bf16.mxu0 0
  %572 = vmatmul.mubr.bf16.gmra.mrb[0].mxu0 %v461
  %v573 = vpop.f32.mrb[0].mxu0
  %v574 = vadd.f32 %v260, %v573
  %v575 = vpop.f32.mrb[0].mxu0
  %v576 = vadd.f32 %v262, %v575
  %v577 = vpop.f32.mrb[0].mxu0
  %v578 = vadd.f32 %v264, %v577
  %v579 = vpop.f32.mrb[0].mxu0
  %v580 = vadd.f32 %v266, %v579
  %581 = vmatprep.mubr.bf16.mxu0 0
  %582 = vmatmul.mubr.bf16.gmra.mrb[0].mxu0 %v464
  %v583 = vpop.f32.mrb[0].mxu0
  %v584 = vadd.f32 %v270, %v583
  %v585 = vpop.f32.mrb[0].mxu0
  %v586 = vadd.f32 %v272, %v585
  %v587 = vpop.f32.mrb[0].mxu0
  %v588 = vadd.f32 %v274, %v587
  %v589 = vpop.f32.mrb[0].mxu0
  %v590 = vadd.f32 %v276, %v589
  %591 = vdwg.mxu0
  %592 = vmatprep.subr.bf16.mxu0 %v477
  %593 = vmatpush1.bf16.msra.mxu0 %v474
  %594 = vmatprep.subr.bf16.mxu0 0
  %595 = vmatpush1.bf16.msra.mxu0 0
  %596 = vmatprep.subr.bf16.mxu0 0
  %597 = vmatpush1.bf16.msra.mxu0 0
  %598 = vmatprep.subr.bf16.mxu0 0
  %599 = vmatpush1.bf16.msra.mxu0 0
  %600 = vmatprep.subr.bf16.mxu0 0
  %601 = vmatpush1.bf16.msra.mxu0 0
  %602 = vmatprep.subr.bf16.mxu0 0
  %603 = vmatpush1.bf16.msra.mxu0 0
  %604 = vmatprep.subr.bf16.mxu0 0
  %605 = vmatpush1.bf16.msra.mxu0 0
  %606 = vmatprep.subr.bf16.mxu0 0
  %607 = vmatpush1.bf16.msra.mxu0 0
  %608 = vmatprep.subr.bf16.mxu0 0
  %609 = vmatpush1.bf16.msra.mxu0 0
  %610 = vmatprep.subr.bf16.mxu0 0
  %611 = vmatpush1.bf16.msra.mxu0 0
  %612 = vmatprep.subr.bf16.mxu0 0
  %613 = vmatpush1.bf16.msra.mxu0 0
  %614 = vmatprep.subr.bf16.mxu0 0
  %615 = vmatpush1.bf16.msra.mxu0 0
  %616 = vmatprep.subr.bf16.mxu0 0
  %617 = vmatpush1.bf16.msra.mxu0 0
  %618 = vmatprep.subr.bf16.mxu0 0
  %619 = vmatpush1.bf16.msra.mxu0 0
  %620 = vmatprep.subr.bf16.mxu0 0
  %621 = vmatpush1.bf16.msra.mxu0 0
  %622 = vmatprep.subr.bf16.mxu0 0
  %623 = vmatpush1.bf16.msra.mxu0 0
  %624 = vmatprep.mubr.bf16.mxu0 0
  %625 = vmatmul.mubr.bf16.gmra.mrb[0].mxu0 %v443
  %v626 = vpop.f32.mrb[0].mxu0
  %v627 = vadd.f32 %v313, %v626
  %v628 = vpop.f32.mrb[0].mxu0
  %v629 = vadd.f32 %v315, %v628
  %v630 = vpop.f32.mrb[0].mxu0
  %v631 = vadd.f32 %v317, %v630
  %v632 = vpop.f32.mrb[0].mxu0
  %v633 = vadd.f32 %v319, %v632
  %634 = vmatprep.mubr.bf16.mxu0 0
  %635 = vmatmul.mubr.bf16.gmra.mrb[0].mxu0 %v446
  %v636 = vpop.f32.mrb[0].mxu0
  %v637 = vadd.f32 %v323, %v636
  %v638 = vpop.f32.mrb[0].mxu0
  %v639 = vadd.f32 %v325, %v638
  %v640 = vpop.f32.mrb[0].mxu0
  %v641 = vadd.f32 %v327, %v640
  %v642 = vpop.f32.mrb[0].mxu0
  %v643 = vadd.f32 %v329, %v642
  %644 = vmatprep.mubr.bf16.mxu0 0
  %645 = vmatmul.mubr.bf16.gmra.mrb[0].mxu0 %v449
  %v646 = vpop.f32.mrb[0].mxu0
  %v647 = vadd.f32 %v333, %v646
  %v648 = vpop.f32.mrb[0].mxu0
  %v649 = vadd.f32 %v335, %v648
  %v650 = vpop.f32.mrb[0].mxu0
  %v651 = vadd.f32 %v337, %v650
  %v652 = vpop.f32.mrb[0].mxu0
  %v653 = vadd.f32 %v339, %v652
  %654 = vmatprep.mubr.bf16.mxu0 0
  %655 = vmatmul.mubr.bf16.gmra.mrb[0].mxu0 %v452
  %v656 = vpop.f32.mrb[0].mxu0
  %v657 = vadd.f32 %v343, %v656
  %v658 = vpop.f32.mrb[0].mxu0
  %v659 = vadd.f32 %v345, %v658
  %v660 = vpop.f32.mrb[0].mxu0
  %v661 = vadd.f32 %v347, %v660
  %v662 = vpop.f32.mrb[0].mxu0
  %v663 = vadd.f32 %v349, %v662
  %664 = vmatprep.mubr.bf16.mxu0 0
  %665 = vmatmul.mubr.bf16.gmra.mrb[0].mxu0 %v455
  %v666 = vpop.f32.mrb[0].mxu0
  %v667 = vadd.f32 %v353, %v666
  %v668 = vpop.f32.mrb[0].mxu0
  %v669 = vadd.f32 %v355, %v668
  %v670 = vpop.f32.mrb[0].mxu0
  %v671 = vadd.f32 %v357, %v670
  %v672 = vpop.f32.mrb[0].mxu0
  %v673 = vadd.f32 %v359, %v672
  %674 = vmatprep.mubr.bf16.mxu0 0
  %675 = vmatmul.mubr.bf16.gmra.mrb[0].mxu0 %v458
  %v676 = vpop.f32.mrb[0].mxu0
  %v677 = vadd.f32 %v363, %v676
  %v678 = vpop.f32.mrb[0].mxu0
  %v679 = vadd.f32 %v365, %v678
  %v680 = vpop.f32.mrb[0].mxu0
  %v681 = vadd.f32 %v367, %v680
  %v682 = vpop.f32.mrb[0].mxu0
  %v683 = vadd.f32 %v369, %v682
  %684 = vmatprep.mubr.bf16.mxu0 0
  %685 = vmatmul.mubr.bf16.gmra.mrb[0].mxu0 %v461
  %v686 = vpop.f32.mrb[0].mxu0
  %v687 = vadd.f32 %v373, %v686
  %v688 = vpop.f32.mrb[0].mxu0
  %v689 = vadd.f32 %v375, %v688
  %v690 = vpop.f32.mrb[0].mxu0
  %v691 = vadd.f32 %v377, %v690
  %v692 = vpop.f32.mrb[0].mxu0
  %v693 = vadd.f32 %v379, %v692
  %694 = vmatprep.mubr.bf16.mxu0 0
  %695 = vmatmul.mubr.bf16.gmra.mrb[0].mxu0 %v464
  %v696 = vpop.f32.mrb[0].mxu0
  %v697 = vadd.f32 %v383, %v696
  %v698 = vpop.f32.mrb[0].mxu0
  %v699 = vadd.f32 %v385, %v698
  %v700 = vpop.f32.mrb[0].mxu0
  %v701 = vadd.f32 %v387, %v700
  %v702 = vpop.f32.mrb[0].mxu0
  %v703 = vadd.f32 %v389, %v702
  %704 = vdwg.mxu0
  %v705 = vld [vmem:[%s4] sm:$0xff]
  %v706 = vld [vmem:[%s4 + $0x8] sm:$0xff]
  %v707 = vld [vmem:[%s4 + $0x10] sm:$0xff]
  %v708 = vld [vmem:[%s4 + $0x18] sm:$0xff]
  %v709 = vld [vmem:[%s4 + $0x20] sm:$0xff]
  %v710 = vld [vmem:[%s4 + $0x28] sm:$0xff]
  %v711 = vld [vmem:[%s4 + $0x30] sm:$0xff]
  %v712 = vld [vmem:[%s4 + $0x38] sm:$0xff]
  %v713 = vld [vmem:[%s4 + $0x40] sm:$0xff]
  %v714 = vld [vmem:[%s4 + $0x48] sm:$0xff]
  %v715 = vld [vmem:[%s4 + $0x50] sm:$0xff]
  %v716 = vld [vmem:[%s4 + $0x58] sm:$0xff]
  %v717 = vld [vmem:[%s4 + $0x60] sm:$0xff]
  %v718 = vld [vmem:[%s4 + $0x68] sm:$0xff]
  %v719 = vld [vmem:[%s4 + $0x70] sm:$0xff]
  %v720 = vld [vmem:[%s4 + $0x78] sm:$0xff]
  %722 = vset.pattern.permute.xlu0 0
  %723 = vperm.xlu0 %722, %v705
  %v724 = vpop.permute.xlu0 %723
  %727 = vset.pattern.permute.xlu0 0
  %728 = vperm.xlu0 %727, %v706
  %v729 = vpop.permute.xlu0 %728
  %732 = vset.pattern.permute.xlu0 0
  %733 = vperm.xlu0 %732, %v707
  %v734 = vpop.permute.xlu0 %733
  %737 = vset.pattern.permute.xlu0 0
  %738 = vperm.xlu0 %737, %v708
  %v739 = vpop.permute.xlu0 %738
  %742 = vset.pattern.permute.xlu0 0
  %743 = vperm.xlu0 %742, %v709
  %v744 = vpop.permute.xlu0 %743
  %747 = vset.pattern.permute.xlu0 0
  %748 = vperm.xlu0 %747, %v710
  %v749 = vpop.permute.xlu0 %748
  %752 = vset.pattern.permute.xlu0 0
  %753 = vperm.xlu0 %752, %v711
  %v754 = vpop.permute.xlu0 %753
  %757 = vset.pattern.permute.xlu0 0
  %758 = vperm.xlu0 %757, %v712
  %v759 = vpop.permute.xlu0 %758
  %762 = vset.pattern.permute.xlu0 0
  %763 = vperm.xlu0 %762, %v713
  %v764 = vpop.permute.xlu0 %763
  %767 = vset.pattern.permute.xlu0 0
  %768 = vperm.xlu0 %767, %v714
  %v769 = vpop.permute.xlu0 %768
  %772 = vset.pattern.permute.xlu0 0
  %773 = vperm.xlu0 %772, %v715
  %v774 = vpop.permute.xlu0 %773
  %777 = vset.pattern.permute.xlu0 0
  %778 = vperm.xlu0 %777, %v716
  %v779 = vpop.permute.xlu0 %778
  %782 = vset.pattern.permute.xlu0 0
  %783 = vperm.xlu0 %782, %v717
  %v784 = vpop.permute.xlu0 %783
  %787 = vset.pattern.permute.xlu0 0
  %788 = vperm.xlu0 %787, %v718
  %v789 = vpop.permute.xlu0 %788
  %792 = vset.pattern.permute.xlu0 0
  %793 = vperm.xlu0 %792, %v719
  %v794 = vpop.permute.xlu0 %793
  %797 = vset.pattern.permute.xlu0 0
  %798 = vperm.xlu0 %797, %v720
  %v799 = vpop.permute.xlu0 %798
  %v801 = vadd.f32 %v514, %v724
  %v802 = vadd.f32 %v516, %v724
  %v803 = vadd.f32 %v627, %v724
  %v804 = vadd.f32 %v629, %v724
  %v805 = vadd.f32 %v518, %v729
  %v806 = vadd.f32 %v520, %v729
  %v807 = vadd.f32 %v631, %v729
  %v808 = vadd.f32 %v633, %v729
  %v809 = vadd.f32 %v524, %v734
  %v810 = vadd.f32 %v526, %v734
  %v811 = vadd.f32 %v637, %v734
  %v812 = vadd.f32 %v639, %v734
  %v813 = vadd.f32 %v528, %v739
  %v814 = vadd.f32 %v530, %v739
  %v815 = vadd.f32 %v641, %v739
  %v816 = vadd.f32 %v643, %v739
  %v817 = vadd.f32 %v534, %v744
  %v818 = vadd.f32 %v536, %v744
  %v819 = vadd.f32 %v647, %v744
  %v820 = vadd.f32 %v649, %v744
  %v821 = vadd.f32 %v538, %v749
  %v822 = vadd.f32 %v540, %v749
  %v823 = vadd.f32 %v651, %v749
  %v824 = vadd.f32 %v653, %v749
  %v825 = vadd.f32 %v544, %v754
  %v826 = vadd.f32 %v546, %v754
  %v827 = vadd.f32 %v657, %v754
  %v828 = vadd.f32 %v659, %v754
  %v829 = vadd.f32 %v548, %v759
  %v830 = vadd.f32 %v550, %v759
  %v831 = vadd.f32 %v661, %v759
  %v832 = vadd.f32 %v663, %v759
  %v833 = vadd.f32 %v554, %v764
  %v834 = vadd.f32 %v556, %v764
  %v835 = vadd.f32 %v667, %v764
  %v836 = vadd.f32 %v669, %v764
  %v837 = vadd.f32 %v558, %v769
  %v838 = vadd.f32 %v560, %v769
  %v839 = vadd.f32 %v671, %v769
  %v840 = vadd.f32 %v673, %v769
  %v841 = vadd.f32 %v564, %v774
  %v842 = vadd.f32 %v566, %v774
  %v843 = vadd.f32 %v677, %v774
  %v844 = vadd.f32 %v679, %v774
  %v845 = vadd.f32 %v568, %v779
  %v846 = vadd.f32 %v570, %v779
  %v847 = vadd.f32 %v681, %v779
  %v848 = vadd.f32 %v683, %v779
  %v849 = vadd.f32 %v574, %v784
  %v850 = vadd.f32 %v576, %v784
  %v851 = vadd.f32 %v687, %v784
  %v852 = vadd.f32 %v689, %v784
  %v853 = vadd.f32 %v578, %v789
  %v854 = vadd.f32 %v580, %v789
  %v855 = vadd.f32 %v691, %v789
  %v856 = vadd.f32 %v693, %v789
  %v857 = vadd.f32 %v584, %v794
  %v858 = vadd.f32 %v586, %v794
  %v859 = vadd.f32 %v697, %v794
  %v860 = vadd.f32 %v699, %v794
  %v861 = vadd.f32 %v588, %v799
  %v862 = vadd.f32 %v590, %v799
  %v863 = vadd.f32 %v701, %v799
  %v864 = vadd.f32 %v703, %v799
  %v865 = vmax.f32 %v801, 0.0
  %v866 = vmax.f32 %v802, 0.0
  %v867 = vmax.f32 %v803, 0.0
  %v868 = vmax.f32 %v804, 0.0
  %v869 = vmax.f32 %v805, 0.0
  %v870 = vmax.f32 %v806, 0.0
  %v871 = vmax.f32 %v807, 0.0
  %v872 = vmax.f32 %v808, 0.0
  %v873 = vmax.f32 %v809, 0.0
  %v874 = vmax.f32 %v810, 0.0
  %v875 = vmax.f32 %v811, 0.0
  %v876 = vmax.f32 %v812, 0.0
  %v877 = vmax.f32 %v813, 0.0
  %v878 = vmax.f32 %v814, 0.0
  %v879 = vmax.f32 %v815, 0.0
  %v880 = vmax.f32 %v816, 0.0
  %v881 = vmax.f32 %v817, 0.0
  %v882 = vmax.f32 %v818, 0.0
  %v883 = vmax.f32 %v819, 0.0
  %v884 = vmax.f32 %v820, 0.0
  %v885 = vmax.f32 %v821, 0.0
  %v886 = vmax.f32 %v822, 0.0
  %v887 = vmax.f32 %v823, 0.0
  %v888 = vmax.f32 %v824, 0.0
  %v889 = vmax.f32 %v825, 0.0
  %v890 = vmax.f32 %v826, 0.0
  %v891 = vmax.f32 %v827, 0.0
  %v892 = vmax.f32 %v828, 0.0
  %v893 = vmax.f32 %v829, 0.0
  %v894 = vmax.f32 %v830, 0.0
  %v895 = vmax.f32 %v831, 0.0
  %v896 = vmax.f32 %v832, 0.0
  %v897 = vmax.f32 %v833, 0.0
  %v898 = vmax.f32 %v834, 0.0
  %v899 = vmax.f32 %v835, 0.0
  %v900 = vmax.f32 %v836, 0.0
  %v901 = vmax.f32 %v837, 0.0
  %v902 = vmax.f32 %v838, 0.0
  %v903 = vmax.f32 %v839, 0.0
  %v904 = vmax.f32 %v840, 0.0
  %v905 = vmax.f32 %v841, 0.0
  %v906 = vmax.f32 %v842, 0.0
  %v907 = vmax.f32 %v843, 0.0
  %v908 = vmax.f32 %v844, 0.0
  %v909 = vmax.f32 %v845, 0.0
  %v910 = vmax.f32 %v846, 0.0
  %v911 = vmax.f32 %v847, 0.0
  %v912 = vmax.f32 %v848, 0.0
  %v913 = vmax.f32 %v849, 0.0
  %v914 = vmax.f32 %v850, 0.0
  %v915 = vmax.f32 %v851, 0.0
  %v916 = vmax.f32 %v852, 0.0
  %v917 = vmax.f32 %v853, 0.0
  %v918 = vmax.f32 %v854, 0.0
  %v919 = vmax.f32 %v855, 0.0
  %v920 = vmax.f32 %v856, 0.0
  %v921 = vmax.f32 %v857, 0.0
  %v922 = vmax.f32 %v858, 0.0
  %v923 = vmax.f32 %v859, 0.0
  %v924 = vmax.f32 %v860, 0.0
  %v925 = vmax.f32 %v861, 0.0
  %v926 = vmax.f32 %v862, 0.0
  %v927 = vmax.f32 %v863, 0.0
  %v928 = vmax.f32 %v864, 0.0
  %v929 = vld [vmem:[%s5] sm:$0xf]
  %v930 = vld [vmem:[%s5 + $0x4] sm:$0xf]
  %v931 = vld [vmem:[%s5 + $0x8] sm:$0xf]
  %v932 = vld [vmem:[%s5 + $0xc] sm:$0xf]
  %v933 = vld [vmem:[%s5 + $0x10] sm:$0xf]
  %v934 = vld [vmem:[%s5 + $0x14] sm:$0xf]
  %v935 = vld [vmem:[%s5 + $0x18] sm:$0xf]
  %v936 = vld [vmem:[%s5 + $0x1c] sm:$0xf]
  %v937 = vpack.c.bf16 %v869, %v865
  %v938 = vpack.c.bf16 %v870, %v866
  %v939 = vpack.c.bf16 %v871, %v867
  %v940 = vpack.c.bf16 %v872, %v868
  %v941 = vpack.c.bf16 %v877, %v873
  %v942 = vpack.c.bf16 %v878, %v874
  %v943 = vpack.c.bf16 %v879, %v875
  %v944 = vpack.c.bf16 %v880, %v876
  %v945 = vpack.c.bf16 %v885, %v881
  %v946 = vpack.c.bf16 %v886, %v882
  %v947 = vpack.c.bf16 %v887, %v883
  %v948 = vpack.c.bf16 %v888, %v884
  %v949 = vpack.c.bf16 %v893, %v889
  %v950 = vpack.c.bf16 %v894, %v890
  %v951 = vpack.c.bf16 %v895, %v891
  %v952 = vpack.c.bf16 %v896, %v892
  %v953 = vpack.c.bf16 %v901, %v897
  %v954 = vpack.c.bf16 %v902, %v898
  %v955 = vpack.c.bf16 %v903, %v899
  %v956 = vpack.c.bf16 %v904, %v900
  %v957 = vpack.c.bf16 %v909, %v905
  %v958 = vpack.c.bf16 %v910, %v906
  %v959 = vpack.c.bf16 %v911, %v907
  %v960 = vpack.c.bf16 %v912, %v908
  %v961 = vpack.c.bf16 %v917, %v913
  %v962 = vpack.c.bf16 %v918, %v914
  %v963 = vpack.c.bf16 %v919, %v915
  %v964 = vpack.c.bf16 %v920, %v916
  %v965 = vpack.c.bf16 %v925, %v921
  %v966 = vpack.c.bf16 %v926, %v922
  %v967 = vpack.c.bf16 %v927, %v923
  %v968 = vpack.c.bf16 %v928, %v924
  %v969 = vld [vmem:[%s6] sm:$0xff]
  %v970 = vld [vmem:[%s6 + $0x8] sm:$0xff]
  %v971 = vld [vmem:[%s6 + $0x10] sm:$0xff]
  %v972 = vld [vmem:[%s6 + $0x18] sm:$0xff]
  %v973 = vld [vmem:[%s6 + $0x20] sm:$0xff]
  %v974 = vld [vmem:[%s6 + $0x28] sm:$0xff]
  %v975 = vld [vmem:[%s6 + $0x30] sm:$0xff]
  %v976 = vld [vmem:[%s6 + $0x38] sm:$0xff]
  %978 = vset.pattern.permute.xlu0 0
  %979 = vperm.xlu0 %978, %v969
  %v980 = vpop.permute.xlu0 %979
  %983 = vset.pattern.permute.xlu0 0
  %984 = vperm.xlu0 %983, %v970
  %v985 = vpop.permute.xlu0 %984
  %988 = vset.pattern.permute.xlu0 0
  %989 = vperm.xlu0 %988, %v971
  %v990 = vpop.permute.xlu0 %989
  %993 = vset.pattern.permute.xlu0 0
  %994 = vperm.xlu0 %993, %v972
  %v995 = vpop.permute.xlu0 %994
  %998 = vset.pattern.permute.xlu0 0
  %999 = vperm.xlu0 %998, %v973
  %v1000 = vpop.permute.xlu0 %999
  %1003 = vset.pattern.permute.xlu0 0
  %1004 = vperm.xlu0 %1003, %v974
  %v1005 = vpop.permute.xlu0 %1004
  %1008 = vset.pattern.permute.xlu0 0
  %1009 = vperm.xlu0 %1008, %v975
  %v1010 = vpop.permute.xlu0 %1009
  %1013 = vset.pattern.permute.xlu0 0
  %1014 = vperm.xlu0 %1013, %v976
  %v1015 = vpop.permute.xlu0 %1014
  %v1025 = vunpack.c.l.b16 %v929
  %v1026 = vunpack.c.l.b16 %v930
  %v1027 = vunpack.c.l.b16 %v931
  %v1028 = vunpack.c.l.b16 %v932
  %v1029 = vunpack.c.l.b16 %v933
  %v1030 = vunpack.c.l.b16 %v934
  %v1031 = vunpack.c.l.b16 %v935
  %v1032 = vunpack.c.l.b16 %v936
  %v1033 = vpack.c.b16 %v1026, %v1025
  %v1034 = vpack.c.b16 %v1028, %v1027
  %v1035 = vpack.c.b16 %v1030, %v1029
  %v1036 = vpack.c.b16 %v1032, %v1031
  %1041 = vmatprep.subr.bf16.mxu0 %v938
  %1042 = vmatpush1.bf16.msra.mxu0 %v937
  %1043 = vmatprep.subr.bf16.mxu0 %v942
  %1044 = vmatpush1.bf16.msra.mxu0 %v941
  %1045 = vmatprep.subr.bf16.mxu0 %v946
  %1046 = vmatpush1.bf16.msra.mxu0 %v945
  %1047 = vmatprep.subr.bf16.mxu0 %v950
  %1048 = vmatpush1.bf16.msra.mxu0 %v949
  %1049 = vmatprep.subr.bf16.mxu0 %v954
  %1050 = vmatpush1.bf16.msra.mxu0 %v953
  %1051 = vmatprep.subr.bf16.mxu0 %v958
  %1052 = vmatpush1.bf16.msra.mxu0 %v957
  %1053 = vmatprep.subr.bf16.mxu0 %v962
  %1054 = vmatpush1.bf16.msra.mxu0 %v961
  %1055 = vmatprep.subr.bf16.mxu0 %v966
  %1056 = vmatpush1.bf16.msra.mxu0 %v965
  %1057 = vmatprep.subr.bf16.mxu0 0
  %1058 = vmatpush1.bf16.msra.mxu0 0
  %1059 = vmatprep.subr.bf16.mxu0 0
  %1060 = vmatpush1.bf16.msra.mxu0 0
  %1061 = vmatprep.subr.bf16.mxu0 0
  %1062 = vmatpush1.bf16.msra.mxu0 0
  %1063 = vmatprep.subr.bf16.mxu0 0
  %1064 = vmatpush1.bf16.msra.mxu0 0
  %1065 = vmatprep.subr.bf16.mxu0 0
  %1066 = vmatpush1.bf16.msra.mxu0 0
  %1067 = vmatprep.subr.bf16.mxu0 0
  %1068 = vmatpush1.bf16.msra.mxu0 0
  %1069 = vmatprep.subr.bf16.mxu0 0
  %1070 = vmatpush1.bf16.msra.mxu0 0
  %1071 = vmatprep.subr.bf16.mxu0 0
  %1072 = vmatpush1.bf16.msra.mxu0 0
  %1073 = vmatprep.mubr.bf16.mxu0 0
  %1074 = vmatmul.mubr.bf16.gmra.mrb[0].mxu0 %v1033
  %v1075 = vpop.f32.mrb[0].mxu0
  %v1076 = vadd.f32 %v980, %v1075
  %v1077 = vpop.f32.mrb[0].mxu0
  %v1078 = vadd.f32 %v980, %v1077
  %v1079 = vpop.f32.mrb[0].mxu0
  %v1080 = vadd.f32 %v985, %v1079
  %v1081 = vpop.f32.mrb[0].mxu0
  %v1082 = vadd.f32 %v985, %v1081
  %1083 = vmatprep.mubr.bf16.mxu0 0
  %1084 = vmatmul.mubr.bf16.gmra.mrb[0].mxu0 %v1034
  %v1085 = vpop.f32.mrb[0].mxu0
  %v1086 = vadd.f32 %v990, %v1085
  %v1087 = vpop.f32.mrb[0].mxu0
  %v1088 = vadd.f32 %v990, %v1087
  %v1089 = vpop.f32.mrb[0].mxu0
  %v1090 = vadd.f32 %v995, %v1089
  %v1091 = vpop.f32.mrb[0].mxu0
  %v1092 = vadd.f32 %v995, %v1091
  %1093 = vmatprep.mubr.bf16.mxu0 0
  %1094 = vmatmul.mubr.bf16.gmra.mrb[0].mxu0 %v1035
  %v1095 = vpop.f32.mrb[0].mxu0
  %v1096 = vadd.f32 %v1000, %v1095
  %v1097 = vpop.f32.mrb[0].mxu0
  %v1098 = vadd.f32 %v1000, %v1097
  %v1099 = vpop.f32.mrb[0].mxu0
  %v1100 = vadd.f32 %v1005, %v1099
  %v1101 = vpop.f32.mrb[0].mxu0
  %v1102 = vadd.f32 %v1005, %v1101
  %1103 = vmatprep.mubr.bf16.mxu0 0
  %1104 = vmatmul.mubr.bf16.gmra.mrb[0].mxu0 %v1036
  %v1105 = vpop.f32.mrb[0].mxu0
  %v1106 = vadd.f32 %v1010, %v1105
  %v1107 = vpop.f32.mrb[0].mxu0
  %v1108 = vadd.f32 %v1010, %v1107
  %v1109 = vpop.f32.mrb[0].mxu0
  %v1110 = vadd.f32 %v1015, %v1109
  %v1111 = vpop.f32.mrb[0].mxu0
  %v1112 = vadd.f32 %v1015, %v1111
  %1113 = vdwg.mxu0
  %1114 = vmatprep.subr.bf16.mxu0 %v940
  %1115 = vmatpush1.bf16.msra.mxu0 %v939
  %1116 = vmatprep.subr.bf16.mxu0 %v944
  %1117 = vmatpush1.bf16.msra.mxu0 %v943
  %1118 = vmatprep.subr.bf16.mxu0 %v948
  %1119 = vmatpush1.bf16.msra.mxu0 %v947
  %1120 = vmatprep.subr.bf16.mxu0 %v952
  %1121 = vmatpush1.bf16.msra.mxu0 %v951
  %1122 = vmatprep.subr.bf16.mxu0 %v956
  %1123 = vmatpush1.bf16.msra.mxu0 %v955
  %1124 = vmatprep.subr.bf16.mxu0 %v960
  %1125 = vmatpush1.bf16.msra.mxu0 %v959
  %1126 = vmatprep.subr.bf16.mxu0 %v964
  %1127 = vmatpush1.bf16.msra.mxu0 %v963
  %1128 = vmatprep.subr.bf16.mxu0 %v968
  %1129 = vmatpush1.bf16.msra.mxu0 %v967
  %1130 = vmatprep.subr.bf16.mxu0 0
  %1131 = vmatpush1.bf16.msra.mxu0 0
  %1132 = vmatprep.subr.bf16.mxu0 0
  %1133 = vmatpush1.bf16.msra.mxu0 0
  %1134 = vmatprep.subr.bf16.mxu0 0
  %1135 = vmatpush1.bf16.msra.mxu0 0
  %1136 = vmatprep.subr.bf16.mxu0 0
  %1137 = vmatpush1.bf16.msra.mxu0 0
  %1138 = vmatprep.subr.bf16.mxu0 0
  %1139 = vmatpush1.bf16.msra.mxu0 0
  %1140 = vmatprep.subr.bf16.mxu0 0
  %1141 = vmatpush1.bf16.msra.mxu0 0
  %1142 = vmatprep.subr.bf16.mxu0 0
  %1143 = vmatpush1.bf16.msra.mxu0 0
  %1144 = vmatprep.subr.bf16.mxu0 0
  %1145 = vmatpush1.bf16.msra.mxu0 0
  %1146 = vmatprep.mubr.bf16.mxu0 0
  %1147 = vmatmul.mubr.bf16.gmra.mrb[0].mxu0 %v1033
  %v1148 = vpop.f32.mrb[0].mxu0
  %v1149 = vadd.f32 %v980, %v1148
  %v1150 = vpop.f32.mrb[0].mxu0
  %v1151 = vadd.f32 %v980, %v1150
  %v1152 = vpop.f32.mrb[0].mxu0
  %v1153 = vadd.f32 %v985, %v1152
  %v1154 = vpop.f32.mrb[0].mxu0
  %v1155 = vadd.f32 %v985, %v1154
  %1156 = vmatprep.mubr.bf16.mxu0 0
  %1157 = vmatmul.mubr.bf16.gmra.mrb[0].mxu0 %v1034
  %v1158 = vpop.f32.mrb[0].mxu0
  %v1159 = vadd.f32 %v990, %v1158
  %v1160 = vpop.f32.mrb[0].mxu0
  %v1161 = vadd.f32 %v990, %v1160
  %v1162 = vpop.f32.mrb[0].mxu0
  %v1163 = vadd.f32 %v995, %v1162
  %v1164 = vpop.f32.mrb[0].mxu0
  %v1165 = vadd.f32 %v995, %v1164
  %1166 = vmatprep.mubr.bf16.mxu0 0
  %1167 = vmatmul.mubr.bf16.gmra.mrb[0].mxu0 %v1035
  %v1168 = vpop.f32.mrb[0].mxu0
  %v1169 = vadd.f32 %v1000, %v1168
  %v1170 = vpop.f32.mrb[0].mxu0
  %v1171 = vadd.f32 %v1000, %v1170
  %v1172 = vpop.f32.mrb[0].mxu0
  %v1173 = vadd.f32 %v1005, %v1172
  %v1174 = vpop.f32.mrb[0].mxu0
  %v1175 = vadd.f32 %v1005, %v1174
  %1176 = vmatprep.mubr.bf16.mxu0 0
  %1177 = vmatmul.mubr.bf16.gmra.mrb[0].mxu0 %v1036
  %v1178 = vpop.f32.mrb[0].mxu0
  %v1179 = vadd.f32 %v1010, %v1178
  %v1180 = vpop.f32.mrb[0].mxu0
  %v1181 = vadd.f32 %v1010, %v1180
  %v1182 = vpop.f32.mrb[0].mxu0
  %v1183 = vadd.f32 %v1015, %v1182
  %v1184 = vpop.f32.mrb[0].mxu0
  %v1185 = vadd.f32 %v1015, %v1184
  %1186 = vdwg.mxu0
  %v1187 = vmax.f32 %v1076, 0.0
  %v1188 = vmax.f32 %v1078, 0.0
  %v1189 = vmax.f32 %v1149, 0.0
  %v1190 = vmax.f32 %v1151, 0.0
  %v1191 = vmax.f32 %v1080, 0.0
  %v1192 = vmax.f32 %v1082, 0.0
  %v1193 = vmax.f32 %v1153, 0.0
  %v1194 = vmax.f32 %v1155, 0.0
  %v1195 = vmax.f32 %v1086, 0.0
  %v1196 = vmax.f32 %v1088, 0.0
  %v1197 = vmax.f32 %v1159, 0.0
  %v1198 = vmax.f32 %v1161, 0.0
  %v1199 = vmax.f32 %v1090, 0.0
  %v1200 = vmax.f32 %v1092, 0.0
  %v1201 = vmax.f32 %v1163, 0.0
  %v1202 = vmax.f32 %v1165, 0.0
  %v1203 = vmax.f32 %v1096, 0.0
  %v1204 = vmax.f32 %v1098, 0.0
  %v1205 = vmax.f32 %v1169, 0.0
  %v1206 = vmax.f32 %v1171, 0.0
  %v1207 = vmax.f32 %v1100, 0.0
  %v1208 = vmax.f32 %v1102, 0.0
  %v1209 = vmax.f32 %v1173, 0.0
  %v1210 = vmax.f32 %v1175, 0.0
  %v1211 = vmax.f32 %v1106, 0.0
  %v1212 = vmax.f32 %v1108, 0.0
  %v1213 = vmax.f32 %v1179, 0.0
  %v1214 = vmax.f32 %v1181, 0.0
  %v1215 = vmax.f32 %v1110, 0.0
  %v1216 = vmax.f32 %v1112, 0.0
  %v1217 = vmax.f32 %v1183, 0.0
  %v1218 = vmax.f32 %v1185, 0.0
  %v1219 = vld [vmem:[%s7] sm:$0x1]
  %v1220 = vpack.c.bf16 %v1191, %v1187
  %v1221 = vpack.c.bf16 %v1192, %v1188
  %v1222 = vpack.c.bf16 %v1193, %v1189
  %v1223 = vpack.c.bf16 %v1194, %v1190
  %v1224 = vpack.c.bf16 %v1199, %v1195
  %v1225 = vpack.c.bf16 %v1200, %v1196
  %v1226 = vpack.c.bf16 %v1201, %v1197
  %v1227 = vpack.c.bf16 %v1202, %v1198
  %v1228 = vpack.c.bf16 %v1207, %v1203
  %v1229 = vpack.c.bf16 %v1208, %v1204
  %v1230 = vpack.c.bf16 %v1209, %v1205
  %v1231 = vpack.c.bf16 %v1210, %v1206
  %v1232 = vpack.c.bf16 %v1215, %v1211
  %v1233 = vpack.c.bf16 %v1216, %v1212
  %v1234 = vpack.c.bf16 %v1217, %v1213
  %v1235 = vpack.c.bf16 %v1218, %v1214
  %s1236 = sld [smem:[#allocation2]]
  %v1237 = vstv %s1236
  %vm1238 = vcmask 523264
  %v1240 = vsel %vm1238, %v1219, 0
  %1242 = vmatprep.subr.bf16.mxu0 %v1221
  %1243 = vmatpush1.bf16.msra.mxu0 %v1220
  %1244 = vmatprep.subr.bf16.mxu0 %v1225
  %1245 = vmatpush1.bf16.msra.mxu0 %v1224
  %1246 = vmatprep.subr.bf16.mxu0 %v1229
  %1247 = vmatpush1.bf16.msra.mxu0 %v1228
  %1248 = vmatprep.subr.bf16.mxu0 %v1233
  %1249 = vmatpush1.bf16.msra.mxu0 %v1232
  %1250 = vmatprep.subr.bf16.mxu0 0
  %1251 = vmatpush1.bf16.msra.mxu0 0
  %1252 = vmatprep.subr.bf16.mxu0 0
  %1253 = vmatpush1.bf16.msra.mxu0 0
  %1254 = vmatprep.subr.bf16.mxu0 0
  %1255 = vmatpush1.bf16.msra.mxu0 0
  %1256 = vmatprep.subr.bf16.mxu0 0
  %1257 = vmatpush1.bf16.msra.mxu0 0
  %1258 = vmatprep.subr.bf16.mxu0 0
  %1259 = vmatpush1.bf16.msra.mxu0 0
  %1260 = vmatprep.subr.bf16.mxu0 0
  %1261 = vmatpush1.bf16.msra.mxu0 0
  %1262 = vmatprep.subr.bf16.mxu0 0
  %1263 = vmatpush1.bf16.msra.mxu0 0
  %1264 = vmatprep.subr.bf16.mxu0 0
  %1265 = vmatpush1.bf16.msra.mxu0 0
  %1266 = vmatprep.subr.bf16.mxu0 0
  %1267 = vmatpush1.bf16.msra.mxu0 0
  %1268 = vmatprep.subr.bf16.mxu0 0
  %1269 = vmatpush1.bf16.msra.mxu0 0
  %1270 = vmatprep.subr.bf16.mxu0 0
  %1271 = vmatpush1.bf16.msra.mxu0 0
  %1272 = vmatprep.subr.bf16.mxu0 0
  %1273 = vmatpush1.bf16.msra.mxu0 0
  %1274 = vmatprep.mubr.bf16.mxu0 0
  %1275 = vmatmul.mubr.bf16.gmra.mrb[0].mxu0 %v1240
  %v1276 = vpop.f32.mrb[0].mxu0
  %v1277 = vadd.f32 %v1237, %v1276
  %v1278 = vpop.f32.mrb[0].mxu0
  %v1279 = vadd.f32 %v1237, %v1278
  %v1280 = vpop.f32.mrb[0].mxu0
  %v1281 = vpop.f32.mrb[0].mxu0
  %1282 = vdwg.mxu0
  %1283 = vmatprep.subr.bf16.mxu0 %v1223
  %1284 = vmatpush1.bf16.msra.mxu0 %v1222
  %1285 = vmatprep.subr.bf16.mxu0 %v1227
  %1286 = vmatpush1.bf16.msra.mxu0 %v1226
  %1287 = vmatprep.subr.bf16.mxu0 %v1231
  %1288 = vmatpush1.bf16.msra.mxu0 %v1230
  %1289 = vmatprep.subr.bf16.mxu0 %v1235
  %1290 = vmatpush1.bf16.msra.mxu0 %v1234
  %1291 = vmatprep.subr.bf16.mxu0 0
  %1292 = vmatpush1.bf16.msra.mxu0 0
  %1293 = vmatprep.subr.bf16.mxu0 0
  %1294 = vmatpush1.bf16.msra.mxu0 0
  %1295 = vmatprep.subr.bf16.mxu0 0
  %1296 = vmatpush1.bf16.msra.mxu0 0
  %1297 = vmatprep.subr.bf16.mxu0 0
  %1298 = vmatpush1.bf16.msra.mxu0 0
  %1299 = vmatprep.subr.bf16.mxu0 0
  %1300 = vmatpush1.bf16.msra.mxu0 0
  %1301 = vmatprep.subr.bf16.mxu0 0
  %1302 = vmatpush1.bf16.msra.mxu0 0
  %1303 = vmatprep.subr.bf16.mxu0 0
  %1304 = vmatpush1.bf16.msra.mxu0 0
  %1305 = vmatprep.subr.bf16.mxu0 0
  %1306 = vmatpush1.bf16.msra.mxu0 0
  %1307 = vmatprep.subr.bf16.mxu0 0
  %1308 = vmatpush1.bf16.msra.mxu0 0
  %1309 = vmatprep.subr.bf16.mxu0 0
  %1310 = vmatpush1.bf16.msra.mxu0 0
  %1311 = vmatprep.subr.bf16.mxu0 0
  %1312 = vmatpush1.bf16.msra.mxu0 0
  %1313 = vmatprep.subr.bf16.mxu0 0
  %1314 = vmatpush1.bf16.msra.mxu0 0
  %1315 = vmatprep.mubr.bf16.mxu0 0
  %1316 = vmatmul.mubr.bf16.gmra.mrb[0].mxu0 %v1240
  %v1317 = vpop.f32.mrb[0].mxu0
  %v1318 = vadd.f32 %v1237, %v1317
  %v1319 = vpop.f32.mrb[0].mxu0
  %v1320 = vadd.f32 %v1237, %v1319
  %v1321 = vpop.f32.mrb[0].mxu0
  %v1322 = vpop.f32.mrb[0].mxu0
  %1323 = vdwg.mxu0
  %v1328 = vcombine.low %v1277, %v1279
  %v1329 = vcombine.low %v1318, %v1320
  %v1331 = vunpack.c.l.s4 1966171168
  %v1332 = vunpack.c.0.s8 %v1331
  %v1333 = vlaneseq
  %v1334 = vshrl.u32 %v1333, 7
  %v1335 = vsub.s32 %v1332, %v1334
  %v1336 = vrot.slane %v1328, %v1335
  %v1338 = vunpack.c.l.s4 1966171168
  %v1339 = vunpack.c.0.s8 %v1338
  %v1340 = vlaneseq
  %v1341 = vshrl.u32 %v1340, 7
  %v1342 = vsub.s32 %v1339, %v1341
  %v1343 = vrot.slane %v1329, %v1342
  %v1344 = vcombine.low %v1336, %v1343
  %v1346 = vunpack.c.l.s4 1966171168
  %v1347 = vunpack.c.0.s8 %v1346
  %v1348 = vlaneseq
  %v1349 = vshrl.u32 %v1348, 7
  %v1350 = vsub.s32 %v1347, %v1349
  %v1351 = vrot.slane %v1344, %v1350
  %v1353 = vlaneseq
  %vm1354 = vcmp.ge.s32.totalorder %v1353, 0
  %vm1355 = vcmp.lt.s32.totalorder %v1353, 512
  %vm1356 = vmand %vm1354, %vm1355
  %1357 = vst.msk [vmem:[%s9] sm:$0xf] %vm1356, %v1351
  // Predicated region
  $region38: #{critic_forward.1} parent=0 // pred_check
    _
  $region39: #{critic_forward.1} parent=0 // pred_check_branch
    %1359 = sbr.rel (0) target = $region41
  $region40: #{critic_forward.1} parent=0 // pred_region
    _
  $region41: #{critic_forward.1} parent=0 // pred_fallthru
    _
  // Predicated region
  $region42: #{critic_forward.1} parent=0 // pred_check
    _
  $region43: #{critic_forward.1} parent=0 // pred_check_branch
    %1361 = sbr.rel (0) target = $region45
  $region44: #{critic_forward.1} parent=0 // pred_region
    _
  $region45: #{critic_forward.1} parent=0 // pred_fallthru
    _

</llo_original>
